<compile_context>
chip_gen: v5e
topology: v5e:2x2
jax: 0.10.0
libtpu: 0.0.40
codegen_flags: <defaults>
</compile_context>

<pallas_src>
import jax
import jax.numpy as jnp
from jax.experimental import pallas as pl
from jax.experimental.pallas import tpu as pltpu

D_IN = 100      # generator latent dim
D_HID = 128
D_OUT = 784

K_PAD = 128     # contraction dim padded to a lane multiple
SUBLANE = 16    # bf16 sublane packing -> batch tiles are multiples of 16


def _round_up(x, m):
    return (x + m - 1) // m * m


def generator_kernel(x_ref, w1_ref, b1_ref, w2_ref, b2_ref, o_ref):
    # First linear + ReLU: bf16 MXU matmul, f32 accumulate, f32 tail.
    h = jnp.dot(x_ref[...], w1_ref[...], preferred_element_type=jnp.float32)
    h = jnp.maximum(h + b1_ref[...], 0.0)
    # Second linear + Tanh + Sigmoid (EUP), f32 tail, bf16 store.
    y = jnp.dot(h.astype(jnp.bfloat16), w2_ref[...],
                preferred_element_type=jnp.float32)
    y = jax.nn.sigmoid(jnp.tanh(y + b2_ref[...]))
    o_ref[...] = y.astype(o_ref.dtype)


def prepare_params(w1, b1, w2, b2):
    """One-time weight prep (pad K to 128, convert weights to bf16).

    Hoisted out of the forward hot path so it isn't re-executed per call.
    """
    w1_p = jnp.zeros((K_PAD, D_HID), jnp.bfloat16).at[:D_IN, :].set(
        w1.astype(jnp.bfloat16))
    w2_bf = w2.astype(jnp.bfloat16)                      # (128, 784)
    b1_f = b1.reshape(1, D_HID).astype(jnp.float32)
    b2_f = b2.reshape(1, D_OUT).astype(jnp.float32)
    return w1_p, b1_f, w2_bf, b2_f


def _choose_tb(B, tb_max):
    """Batch tile: multiple of 16, <= tb_max, >= 2 grid steps when B allows
    (so both v7x TensorCores get work), padding bounded by n_steps*16 rows."""
    if B <= SUBLANE:
        return _round_up(B, 8)            # single block == full array
    tb_cap = max(SUBLANE, _round_up(tb_max, SUBLANE))
    b_min = _round_up(B, SUBLANE)
    n_steps = max(2, pl.cdiv(b_min, tb_cap))
    return _round_up(pl.cdiv(b_min, n_steps), SUBLANE)


def generator_forward(x, w1_p, b1, w2_bf, b2, *, tb_max=512,
                      out_dtype=jnp.bfloat16):
    """y = sigmoid(tanh(relu(x @ w1 + b1) @ w2 + b2)).

    x    : (B, 100) f32
    w1_p : (128, 128) bf16   b1: (1, 128) f32       (from prepare_params)
    w2_bf: (128, 784) bf16   b2: (1, 784) f32
    Returns (B, 784) in `out_dtype` (default bf16; intentional precision
    relaxation — upcast outside if f32 is required).
    """
    B = x.shape[0]
    tb = _choose_tb(B, tb_max)
    n_steps = pl.cdiv(B, tb)
    b_pad = tb * n_steps

    # Zero-pad batch + K dim and cast to bf16 in one op (lane-dense loads,
    # clean 128-wide MXU K tiles, half the HBM read for x).
    x_p = jnp.zeros((b_pad, K_PAD), jnp.bfloat16).at[:B, :D_IN].set(
        x.astype(jnp.bfloat16))

    out_bytes = 2 if out_dtype == jnp.bfloat16 else 4
    cost = pl.CostEstimate(
        flops=2 * b_pad * (K_PAD * D_HID + D_HID * D_OUT),
        transcendentals=2 * b_pad * D_OUT,                 # tanh + sigmoid
        bytes_accessed=(b_pad * K_PAD * 2 + K_PAD * D_HID * 2
                        + D_HID * 4 + D_HID * D_OUT * 2 + D_OUT * 4
                        + b_pad * D_OUT * out_bytes),
    )

    out = pl.pallas_call(
        generator_kernel,
        out_shape=jax.ShapeDtypeStruct((b_pad, D_OUT), out_dtype),
        grid=(n_steps,),
        in_specs=[
            pl.BlockSpec((tb, K_PAD), lambda i: (i, 0)),      # x: batch-tiled
            pl.BlockSpec((K_PAD, D_HID), lambda i: (0, 0)),   # w1: resident
            pl.BlockSpec((1, D_HID), lambda i: (0, 0)),       # b1: resident
            pl.BlockSpec((D_HID, D_OUT), lambda i: (0, 0)),   # w2: resident
            pl.BlockSpec((1, D_OUT), lambda i: (0, 0)),       # b2: resident
        ],
        out_specs=pl.BlockSpec((tb, D_OUT), lambda i: (i, 0)),
        compiler_params=pltpu.CompilerParams(
            dimension_semantics=("parallel",),   # v7x: split batch over 2 TCs
            vmem_limit_bytes=32 << 20,
        ),
        cost_estimate=cost,
    )(x_p, w1_p, b1, w2_bf, b2)

    # Only slice when batch padding was actually added (cheap row slice).
    return out if b_pad == B else out[:B]


def init_params(key):
    # Deterministic synthetic parameters (PyTorch-style uniform fan-in init).
    k1, k2, k3, k4 = jax.random.split(key, 4)
    lim1 = 1.0 / jnp.sqrt(100.0)
    lim2 = 1.0 / jnp.sqrt(128.0)
    w1 = jax.random.uniform(k1, (D_IN, D_HID), jnp.float32, -lim1, lim1)
    b1 = jax.random.uniform(k2, (1, D_HID), jnp.float32, -lim1, lim1)
    w2 = jax.random.uniform(k3, (D_HID, D_OUT), jnp.float32, -lim2, lim2)
    b2 = jax.random.uniform(k4, (1, D_OUT), jnp.float32, -lim2, lim2)
    return w1, b1, w2, b2


def reference_forward(x, w1, b1, w2, b2):
    h = jnp.maximum(x @ w1 + b1, 0.0)
    y = jnp.tanh(h @ w2 + b2)
    return jax.nn.sigmoid(y)


if __name__ == "__main__":
    key = jax.random.PRNGKey(0)
    kx, kp = jax.random.split(key)
    w1, b1, w2, b2 = init_params(kp)
    params = prepare_params(w1, b1, w2, b2)   # one-time, outside hot path

    # Small single-step case.
    batch = 8
    x = jax.random.normal(kx, (batch, D_IN), jnp.float32)
    out = jax.block_until_ready(generator_forward(x, *params))
    ref = reference_forward(x, w1, b1, w2, b2)
    assert out.shape == (batch, D_OUT)
    assert out.dtype == jnp.bfloat16
    # bf16 matmul operands + bf16 output -> loosened tolerance vs f32 ref.
    assert jnp.allclose(out.astype(jnp.float32), ref, atol=2e-2, rtol=2e-2)

    # Ragged batch exercising the multi-step grid + batch padding path.
    batch2 = 44
    x2 = jax.random.normal(jax.random.PRNGKey(1), (batch2, D_IN), jnp.float32)
    out2 = jax.block_until_ready(generator_forward(x2, *params, tb_max=16))
    ref2 = reference_forward(x2, w1, b1, w2, b2)
    assert out2.shape == (batch2, D_OUT)
    assert jnp.allclose(out2.astype(jnp.float32), ref2, atol=2e-2, rtol=2e-2)

    print("KERNEL_OK")
</pallas_src>

<mosaic_0001>
module attributes {stable_mosaic.version = 11 : i64} {
  func.func @generator_kernel(%arg0: i32, %arg1: memref<8x128xbf16, #tpu.memory_space<vmem>>, %arg2: memref<128x128xbf16, #tpu.memory_space<vmem>>, %arg3: memref<1x128xf32, #tpu.memory_space<vmem>>, %arg4: memref<128x784xbf16, #tpu.memory_space<vmem>>, %arg5: memref<1x784xf32, #tpu.memory_space<vmem>>, %arg6: memref<8x784xbf16, #tpu.memory_space<vmem>>) attributes {dimension_semantics = [#tpu.dimension_semantics<parallel>], iteration_bounds = array<i64: 1>, scalar_prefetch = 0 : i64, scratch_operands = 0 : i64, tpu.core_type = #tpu.core_type<tc>, window_params = [{transform_indices = @transform_0, window_bounds = array<i64: 8, 128>}, {pipeline_mode = #tpu.pipeline_mode<synchronous>, transform_indices = @transform_1, window_bounds = array<i64: 128, 128>}, {pipeline_mode = #tpu.pipeline_mode<synchronous>, transform_indices = @transform_2, window_bounds = array<i64: 1, 128>}, {pipeline_mode = #tpu.pipeline_mode<synchronous>, transform_indices = @transform_3, window_bounds = array<i64: 128, 784>}, {pipeline_mode = #tpu.pipeline_mode<synchronous>, transform_indices = @transform_4, window_bounds = array<i64: 1, 784>}, {transform_indices = @transform_5, window_bounds = array<i64: 8, 784>}]} {
    %c0 = arith.constant 0 : index
    %c0_0 = arith.constant 0 : index
    %0 = vector.load %arg1[%c0, %c0_0] : memref<8x128xbf16, #tpu.memory_space<vmem>>, vector<8x128xbf16>
    %c0_1 = arith.constant 0 : index
    %c0_2 = arith.constant 0 : index
    %1 = vector.load %arg2[%c0_1, %c0_2] : memref<128x128xbf16, #tpu.memory_space<vmem>>, vector<128x128xbf16>
    %cst = arith.constant dense<0.000000e+00> : vector<8x128xf32>
    %2 = tpu.matmul %0, %1, %cst {dimension_numbers = #tpu.dot_dimension_numbers<[1], [0], [0], [1], [0, 0, 1, 1], [], []>} : vector<8x128xbf16>, vector<128x128xbf16>, vector<8x128xf32> -> vector<8x128xf32>
    %c0_3 = arith.constant 0 : index
    %c0_4 = arith.constant 0 : index
    %3 = vector.load %arg3[%c0_3, %c0_4] : memref<1x128xf32, #tpu.memory_space<vmem>>, vector<1x128xf32>
    %4 = vector.broadcast %3 : vector<1x128xf32> to vector<8x128xf32>
    %5 = arith.addf %2, %4 : vector<8x128xf32>
    %cst_5 = arith.constant 0.000000e+00 : f32
    %6 = vector.broadcast %cst_5 : f32 to vector<8x128xf32>
    %7 = arith.maximumf %5, %6 : vector<8x128xf32>
    %8 = arith.truncf %7 : vector<8x128xf32> to vector<8x128xbf16>
    %c0_6 = arith.constant 0 : index
    %c0_7 = arith.constant 0 : index
    %9 = vector.load %arg4[%c0_6, %c0_7] : memref<128x784xbf16, #tpu.memory_space<vmem>>, vector<128x784xbf16>
    %cst_8 = arith.constant dense<0.000000e+00> : vector<8x784xf32>
    %10 = tpu.matmul %8, %9, %cst_8 {dimension_numbers = #tpu.dot_dimension_numbers<[1], [0], [0], [1], [0, 0, 1, 1], [], []>} : vector<8x128xbf16>, vector<128x784xbf16>, vector<8x784xf32> -> vector<8x784xf32>
    %c0_9 = arith.constant 0 : index
    %c0_10 = arith.constant 0 : index
    %11 = vector.load %arg5[%c0_9, %c0_10] : memref<1x784xf32, #tpu.memory_space<vmem>>, vector<1x784xf32>
    %12 = vector.broadcast %11 : vector<1x784xf32> to vector<8x784xf32>
    %13 = arith.addf %10, %12 : vector<8x784xf32>
    %14 = math.tanh %13 : vector<8x784xf32>
    %15 = arith.negf %14 : vector<8x784xf32>
    %16 = math.exp %15 : vector<8x784xf32>
    %cst_11 = arith.constant 1.000000e+00 : f32
    %17 = vector.broadcast %cst_11 : f32 to vector<8x784xf32>
    %18 = arith.addf %17, %16 : vector<8x784xf32>
    %19 = arith.divf %17, %18 : vector<8x784xf32>
    %20 = arith.truncf %19 : vector<8x784xf32> to vector<8x784xbf16>
    %c0_12 = arith.constant 0 : index
    %c0_13 = arith.constant 0 : index
    %21 = vector.load %arg6[%c0_12, %c0_13] : memref<8x784xbf16, #tpu.memory_space<vmem>>, vector<8x784xbf16>
    tpu.vector_store %arg6[%c0_12, %c0_13], %20 {strides = array<i32>} : memref<8x784xbf16, #tpu.memory_space<vmem>>, vector<8x784xbf16>,
    return
  }
  func.func @transform_0(%arg0: i32) -> (i32, i32) {
    %c0_i32 = arith.constant 0 : i32
    %c0_i32_0 = arith.constant 0 : i32
    return %arg0, %c0_i32 : i32, i32
  }
  func.func @transform_1(%arg0: i32) -> (i32, i32) {
    %c0_i32 = arith.constant 0 : i32
    %c0_i32_0 = arith.constant 0 : i32
    %c0_i32_1 = arith.constant 0 : i32
    return %c0_i32, %c0_i32_0 : i32, i32
  }
  func.func @transform_2(%arg0: i32) -> (i32, i32) {
    %c0_i32 = arith.constant 0 : i32
    %c0_i32_0 = arith.constant 0 : i32
    %c0_i32_1 = arith.constant 0 : i32
    return %c0_i32, %c0_i32_0 : i32, i32
  }
  func.func @transform_3(%arg0: i32) -> (i32, i32) {
    %c0_i32 = arith.constant 0 : i32
    %c0_i32_0 = arith.constant 0 : i32
    %c0_i32_1 = arith.constant 0 : i32
    return %c0_i32, %c0_i32_0 : i32, i32
  }
  func.func @transform_4(%arg0: i32) -> (i32, i32) {
    %c0_i32 = arith.constant 0 : i32
    %c0_i32_0 = arith.constant 0 : i32
    %c0_i32_1 = arith.constant 0 : i32
    return %c0_i32, %c0_i32_0 : i32, i32
  }
  func.func @transform_5(%arg0: i32) -> (i32, i32) {
    %c0_i32 = arith.constant 0 : i32
    %c0_i32_0 = arith.constant 0 : i32
    return %arg0, %c0_i32 : i32, i32
  }
}

</mosaic_0001>

<llo_original>
// kernel: tpu_custom_call.1
$region0: #{tpu_custom_call.1}
  #allocation0 [shape = 'u32[]', space=smem, size = 0x4, offset = 0x4, fixed_abs, tag = 'smem constant byte address 0x4 - core index']
  #allocation1 [shape = 'u32[72,128]{1,0:T(1,128)}', space=vmem, size = 0x9000, scoped, tag = 'internal scratch']
  %s0 = inlined_call_operand.vmem [shape: bf16[8,128], index: 0, kind: input, shape index: {}]
  %s1 = inlined_call_operand.vmem [shape: bf16[128,128], index: 1, kind: input, shape index: {}]
  %s2 = inlined_call_operand.vmem [shape: f32[1,128], index: 2, kind: input, shape index: {}]
  %s3 = inlined_call_operand.vmem [shape: bf16[128,784], index: 3, kind: input, shape index: {}]
  %s4 = inlined_call_operand.vmem [shape: f32[1,784], index: 4, kind: input, shape index: {}]
  %s5 = inlined_call_operand.hbm [shape: bf16[8,784], index: 5, kind: output, shape index: {}]
  %s6 = sld [smem:[#allocation0]]
  $region30: #{tpu_custom_call.1} parent=0
    _
  %s8 = ssub.s32 1, %s6
  %s9 = scalar_select 0, %s8, %s6
  $region1: #{tpu_custom_call.1} parent=0
    #allocation2 [shape = 'u8[14336]{0}', space=vmem, size = 0x3800, scoped, tag = 'output window, operand 0, single buffered']
    #allocation3 [shape = 's32[1]{0}', space=sflag, size = 0x4, scoped, tag = 'scoped memory for tpu_custom_call.1']
    %10 = vsyncpa [#allocation3], 0
    // Predicated region
    $region2: #{tpu_custom_call.1} parent=1 // pred_check
      _
    $region3: #{tpu_custom_call.1} parent=1 // pred_check_branch
      %12 = sbr.rel (0) target = $region5
    $region4: #{tpu_custom_call.1} parent=1 // pred_region
      _
    $region5: #{tpu_custom_call.1} parent=1 // pred_fallthru
      _
    // Predicated region
    $region6: #{tpu_custom_call.1} parent=1 // pred_check
      _
    $region7: #{tpu_custom_call.1} parent=1 // pred_check_branch
      %14 = sbr.rel (0) target = $region9
    $region8: #{tpu_custom_call.1} parent=1 // pred_region
      _
    $region9: #{tpu_custom_call.1} parent=1 // pred_fallthru
      _
    // Predicated region
    $region10: #{tpu_custom_call.1} parent=1 // pred_check
      _
    $region11: #{tpu_custom_call.1} parent=1 // pred_check_branch
      %16 = sbr.rel (0) target = $region13
    $region12: #{tpu_custom_call.1} parent=1 // pred_region
      _
    $region13: #{tpu_custom_call.1} parent=1 // pred_fallthru
      _
    // Predicated region
    $region14: #{tpu_custom_call.1} parent=1 // pred_check
      _
    $region15: #{tpu_custom_call.1} parent=1 // pred_check_branch
      %18 = sbr.rel (0) target = $region17
    $region16: #{tpu_custom_call.1} parent=1 // pred_region
      _
    $region17: #{tpu_custom_call.1} parent=1 // pred_fallthru
      _
    // Predicated region
    $region18: #{tpu_custom_call.1} parent=1 // pred_check
      _
    $region19: #{tpu_custom_call.1} parent=1 // pred_check_branch
      %20 = sbr.rel (0) target = $region21
    $region20: #{tpu_custom_call.1} parent=1 // pred_region
      _
    $region21: #{tpu_custom_call.1} parent=1 // pred_fallthru
      _
    %v21 = vld [vmem:[%s0] sm:$0xf]
    %v22 = vld [vmem:[%s1] sm:$0xf]
    %v23 = vld [vmem:[%s1 + $0x4] sm:$0xf]
    %v24 = vld [vmem:[%s1 + $0x8] sm:$0xf]
    %v25 = vld [vmem:[%s1 + $0xc] sm:$0xf]
    %v26 = vld [vmem:[%s1 + $0x10] sm:$0xf]
    %v27 = vld [vmem:[%s1 + $0x14] sm:$0xf]
    %v28 = vld [vmem:[%s1 + $0x18] sm:$0xf]
    %v29 = vld [vmem:[%s1 + $0x1c] sm:$0xf]
    %v30 = vld [vmem:[%s1 + $0x20] sm:$0xf]
    %v31 = vld [vmem:[%s1 + $0x24] sm:$0xf]
    %v32 = vld [vmem:[%s1 + $0x28] sm:$0xf]
    %v33 = vld [vmem:[%s1 + $0x2c] sm:$0xf]
    %v34 = vld [vmem:[%s1 + $0x30] sm:$0xf]
    %v35 = vld [vmem:[%s1 + $0x34] sm:$0xf]
    %v36 = vld [vmem:[%s1 + $0x38] sm:$0xf]
    %v37 = vld [vmem:[%s1 + $0x3c] sm:$0xf]
    %v38 = vld [vmem:[%s2] sm:$0x1]
    %v40 = vperm.slane %v38, 0
    %v58 = vunpack.c.l.b16 %v22
    %v59 = vunpack.c.l.b16 %v23
    %v60 = vunpack.c.l.b16 %v24
    %v61 = vunpack.c.l.b16 %v25
    %v62 = vunpack.c.l.b16 %v26
    %v63 = vunpack.c.l.b16 %v27
    %v64 = vunpack.c.l.b16 %v28
    %v65 = vunpack.c.l.b16 %v29
    %v66 = vunpack.c.l.b16 %v30
    %v67 = vunpack.c.l.b16 %v31
    %v68 = vunpack.c.l.b16 %v32
    %v69 = vunpack.c.l.b16 %v33
    %v70 = vunpack.c.l.b16 %v34
    %v71 = vunpack.c.l.b16 %v35
    %v72 = vunpack.c.l.b16 %v36
    %v73 = vunpack.c.l.b16 %v37
    %v74 = vpack.c.b16 %v59, %v58
    %v75 = vpack.c.b16 %v61, %v60
    %v76 = vpack.c.b16 %v63, %v62
    %v77 = vpack.c.b16 %v65, %v64
    %v78 = vpack.c.b16 %v67, %v66
    %v79 = vpack.c.b16 %v69, %v68
    %v80 = vpack.c.b16 %v71, %v70
    %v81 = vpack.c.b16 %v73, %v72
    %90 = vmatpush.bf16.msra.mxu0 %v81
    %91 = vmatpush.bf16.msra.mxu0 %v80
    %92 = vmatpush.bf16.msra.mxu0 %v79
    %93 = vmatpush.bf16.msra.mxu0 %v78
    %94 = vmatpush.bf16.msra.mxu0 %v77
    %95 = vmatpush.bf16.msra.mxu0 %v76
    %96 = vmatpush.bf16.msra.mxu0 %v75
    %97 = vmatpush.bf16.msra.mxu0 %v74
    %98 = vmatmul.bf16.gmra.mxu0 %v21
    %v99 = vpop.f32.mrf.mxu0
    %v100 = vadd.f32 %v40, %v99
    %v101 = vpop.f32.mrf.mxu0
    %102 = vdwg.mxu0
    %v103 = vmax.f32 %v100, 0.0
    %v104 = vpack.c.bf16 %v103, %v103
    %v105 = vld [vmem:[%s3] sm:$0xff]
    %v106 = vld [vmem:[%s3 + $0x8] sm:$0xff]
    %v107 = vld [vmem:[%s3 + $0x10] sm:$0xff]
    %v108 = vld [vmem:[%s3 + $0x18] sm:$0xf]
    %v109 = vld [vmem:[%s3 + $0x1c] sm:$0xff]
    %v110 = vld [vmem:[%s3 + $0x24] sm:$0xff]
    %v111 = vld [vmem:[%s3 + $0x2c] sm:$0xff]
    %v112 = vld [vmem:[%s3 + $0x34] sm:$0xf]
    %v113 = vld [vmem:[%s3 + $0x38] sm:$0xff]
    %v114 = vld [vmem:[%s3 + $0x40] sm:$0xff]
    %v115 = vld [vmem:[%s3 + $0x48] sm:$0xff]
    %v116 = vld [vmem:[%s3 + $0x50] sm:$0xf]
    %v117 = vld [vmem:[%s3 + $0x54] sm:$0xff]
    %v118 = vld [vmem:[%s3 + $0x5c] sm:$0xff]
    %v119 = vld [vmem:[%s3 + $0x64] sm:$0xff]
    %v120 = vld [vmem:[%s3 + $0x6c] sm:$0xf]
    %v121 = vld [vmem:[%s3 + $0x70] sm:$0xff]
    %v122 = vld [vmem:[%s3 + $0x78] sm:$0xff]
    %v123 = vld [vmem:[%s3 + $0x80] sm:$0xff]
    %v124 = vld [vmem:[%s3 + $0x88] sm:$0xf]
    %v125 = vld [vmem:[%s3 + $0x8c] sm:$0xff]
    %v126 = vld [vmem:[%s3 + $0x94] sm:$0xff]
    %v127 = vld [vmem:[%s3 + $0x9c] sm:$0xff]
    %v128 = vld [vmem:[%s3 + $0xa4] sm:$0xf]
    %v129 = vld [vmem:[%s3 + $0xa8] sm:$0xff]
    %v130 = vld [vmem:[%s3 + $0xb0] sm:$0xff]
    %v131 = vld [vmem:[%s3 + $0xb8] sm:$0xff]
    %v132 = vld [vmem:[%s3 + $0xc0] sm:$0xf]
    %v133 = vld [vmem:[%s3 + $0xc4] sm:$0xff]
    %v134 = vld [vmem:[%s3 + $0xcc] sm:$0xff]
    %v135 = vld [vmem:[%s3 + $0xd4] sm:$0xff]
    %v136 = vld [vmem:[%s3 + $0xdc] sm:$0xf]
    %v137 = vld [vmem:[%s3 + $0xe0] sm:$0xff]
    %v138 = vld [vmem:[%s3 + $0xe8] sm:$0xff]
    %v139 = vld [vmem:[%s3 + $0xf0] sm:$0xff]
    %v140 = vld [vmem:[%s3 + $0xf8] sm:$0xf]
    %v141 = vld [vmem:[%s3 + $0xfc] sm:$0xff]
    %v142 = vld [vmem:[%s3 + $0x104] sm:$0xff]
    %v143 = vld [vmem:[%s3 + $0x10c] sm:$0xff]
    %v144 = vld [vmem:[%s3 + $0x114] sm:$0xf]
    %v145 = vld [vmem:[%s3 + $0x118] sm:$0xff]
    %v146 = vld [vmem:[%s3 + $0x120] sm:$0xff]
    %v147 = vld [vmem:[%s3 + $0x128] sm:$0xff]
    %v148 = vld [vmem:[%s3 + $0x130] sm:$0xf]
    %v149 = vld [vmem:[%s3 + $0x134] sm:$0xff]
    %v150 = vld [vmem:[%s3 + $0x13c] sm:$0xff]
    %v151 = vld [vmem:[%s3 + $0x144] sm:$0xff]
    %v152 = vld [vmem:[%s3 + $0x14c] sm:$0xf]
    %v153 = vld [vmem:[%s3 + $0x150] sm:$0xff]
    %v154 = vld [vmem:[%s3 + $0x158] sm:$0xff]
    %v155 = vld [vmem:[%s3 + $0x160] sm:$0xff]
    %v156 = vld [vmem:[%s3 + $0x168] sm:$0xf]
    %v157 = vld [vmem:[%s3 + $0x16c] sm:$0xff]
    %v158 = vld [vmem:[%s3 + $0x174] sm:$0xff]
    %v159 = vld [vmem:[%s3 + $0x17c] sm:$0xff]
    %v160 = vld [vmem:[%s3 + $0x184] sm:$0xf]
    %v161 = vld [vmem:[%s3 + $0x188] sm:$0xff]
    %v162 = vld [vmem:[%s3 + $0x190] sm:$0xff]
    %v163 = vld [vmem:[%s3 + $0x198] sm:$0xff]
    %v164 = vld [vmem:[%s3 + $0x1a0] sm:$0xf]
    %v165 = vld [vmem:[%s3 + $0x1a4] sm:$0xff]
    %v166 = vld [vmem:[%s3 + $0x1ac] sm:$0xff]
    %v167 = vld [vmem:[%s3 + $0x1b4] sm:$0xff]
    %v168 = vld [vmem:[%s3 + $0x1bc] sm:$0xf]
    %v169 = vld [vmem:[%s4] sm:$0x7f]
    %v171 = vperm.slane %v169, 0
    %v172 = vperm.slane %v169, 1
    %v173 = vperm.slane %v169, 2
    %v174 = vperm.slane %v169, 3
    %v175 = vperm.slane %v169, 4
    %v176 = vperm.slane %v169, 5
    %v177 = vperm.slane %v169, 6
    %v249 = vunpack.c.l.b16 %v105
    %v250 = vunpack.c.h.b16 %v105
    %v251 = vunpack.c.l.b16 %v106
    %v252 = vunpack.c.h.b16 %v106
    %v253 = vunpack.c.l.b16 %v107
    %v254 = vunpack.c.h.b16 %v107
    %v255 = vunpack.c.l.b16 %v108
    %v256 = vunpack.c.l.b16 %v109
    %v257 = vunpack.c.h.b16 %v109
    %v258 = vunpack.c.l.b16 %v110
    %v259 = vunpack.c.h.b16 %v110
    %v260 = vunpack.c.l.b16 %v111
    %v261 = vunpack.c.h.b16 %v111
    %v262 = vunpack.c.l.b16 %v112
    %v263 = vunpack.c.l.b16 %v113
    %v264 = vunpack.c.h.b16 %v113
    %v265 = vunpack.c.l.b16 %v114
    %v266 = vunpack.c.h.b16 %v114
    %v267 = vunpack.c.l.b16 %v115
    %v268 = vunpack.c.h.b16 %v115
    %v269 = vunpack.c.l.b16 %v116
    %v270 = vunpack.c.l.b16 %v117
    %v271 = vunpack.c.h.b16 %v117
    %v272 = vunpack.c.l.b16 %v118
    %v273 = vunpack.c.h.b16 %v118
    %v274 = vunpack.c.l.b16 %v119
    %v275 = vunpack.c.h.b16 %v119
    %v276 = vunpack.c.l.b16 %v120
    %v277 = vunpack.c.l.b16 %v121
    %v278 = vunpack.c.h.b16 %v121
    %v279 = vunpack.c.l.b16 %v122
    %v280 = vunpack.c.h.b16 %v122
    %v281 = vunpack.c.l.b16 %v123
    %v282 = vunpack.c.h.b16 %v123
    %v283 = vunpack.c.l.b16 %v124
    %v284 = vunpack.c.l.b16 %v125
    %v285 = vunpack.c.h.b16 %v125
    %v286 = vunpack.c.l.b16 %v126
    %v287 = vunpack.c.h.b16 %v126
    %v288 = vunpack.c.l.b16 %v127
    %v289 = vunpack.c.h.b16 %v127
    %v290 = vunpack.c.l.b16 %v128
    %v291 = vunpack.c.l.b16 %v129
    %v292 = vunpack.c.h.b16 %v129
    %v293 = vunpack.c.l.b16 %v130
    %v294 = vunpack.c.h.b16 %v130
    %v295 = vunpack.c.l.b16 %v131
    %v296 = vunpack.c.h.b16 %v131
    %v297 = vunpack.c.l.b16 %v132
    %v298 = vunpack.c.l.b16 %v133
    %v299 = vunpack.c.h.b16 %v133
    %v300 = vunpack.c.l.b16 %v134
    %v301 = vunpack.c.h.b16 %v134
    %v302 = vunpack.c.l.b16 %v135
    %v303 = vunpack.c.h.b16 %v135
    %v304 = vunpack.c.l.b16 %v136
    %v305 = vunpack.c.l.b16 %v137
    %v306 = vunpack.c.h.b16 %v137
    %v307 = vunpack.c.l.b16 %v138
    %v308 = vunpack.c.h.b16 %v138
    %v309 = vunpack.c.l.b16 %v139
    %v310 = vunpack.c.h.b16 %v139
    %v311 = vunpack.c.l.b16 %v140
    %v312 = vunpack.c.l.b16 %v141
    %v313 = vunpack.c.h.b16 %v141
    %v314 = vunpack.c.l.b16 %v142
    %v315 = vunpack.c.h.b16 %v142
    %v316 = vunpack.c.l.b16 %v143
    %v317 = vunpack.c.h.b16 %v143
    %v318 = vunpack.c.l.b16 %v144
    %v319 = vunpack.c.l.b16 %v145
    %v320 = vunpack.c.h.b16 %v145
    %v321 = vunpack.c.l.b16 %v146
    %v322 = vunpack.c.h.b16 %v146
    %v323 = vunpack.c.l.b16 %v147
    %v324 = vunpack.c.h.b16 %v147
    %v325 = vunpack.c.l.b16 %v148
    %v326 = vunpack.c.l.b16 %v149
    %v327 = vunpack.c.h.b16 %v149
    %v328 = vunpack.c.l.b16 %v150
    %v329 = vunpack.c.h.b16 %v150
    %v330 = vunpack.c.l.b16 %v151
    %v331 = vunpack.c.h.b16 %v151
    %v332 = vunpack.c.l.b16 %v152
    %v333 = vunpack.c.l.b16 %v153
    %v334 = vunpack.c.h.b16 %v153
    %v335 = vunpack.c.l.b16 %v154
    %v336 = vunpack.c.h.b16 %v154
    %v337 = vunpack.c.l.b16 %v155
    %v338 = vunpack.c.h.b16 %v155
    %v339 = vunpack.c.l.b16 %v156
    %v340 = vunpack.c.l.b16 %v157
    %v341 = vunpack.c.h.b16 %v157
    %v342 = vunpack.c.l.b16 %v158
    %v343 = vunpack.c.h.b16 %v158
    %v344 = vunpack.c.l.b16 %v159
    %v345 = vunpack.c.h.b16 %v159
    %v346 = vunpack.c.l.b16 %v160
    %v347 = vunpack.c.l.b16 %v161
    %v348 = vunpack.c.h.b16 %v161
    %v349 = vunpack.c.l.b16 %v162
    %v350 = vunpack.c.h.b16 %v162
    %v351 = vunpack.c.l.b16 %v163
    %v352 = vunpack.c.h.b16 %v163
    %v353 = vunpack.c.l.b16 %v164
    %v354 = vunpack.c.l.b16 %v165
    %v355 = vunpack.c.h.b16 %v165
    %v356 = vunpack.c.l.b16 %v166
    %v357 = vunpack.c.h.b16 %v166
    %v358 = vunpack.c.l.b16 %v167
    %v359 = vunpack.c.h.b16 %v167
    %v360 = vunpack.c.l.b16 %v168
    %v361 = vpack.c.b16 %v256, %v249
    %v362 = vpack.c.b16 %v257, %v250
    %v363 = vpack.c.b16 %v258, %v251
    %v364 = vpack.c.b16 %v259, %v252
    %v365 = vpack.c.b16 %v260, %v253
    %v366 = vpack.c.b16 %v261, %v254
    %v367 = vpack.c.b16 %v262, %v255
    %v368 = vpack.c.b16 %v270, %v263
    %v369 = vpack.c.b16 %v271, %v264
    %v370 = vpack.c.b16 %v272, %v265
    %v371 = vpack.c.b16 %v273, %v266
    %v372 = vpack.c.b16 %v274, %v267
    %v373 = vpack.c.b16 %v275, %v268
    %v374 = vpack.c.b16 %v276, %v269
    %v375 = vpack.c.b16 %v284, %v277
    %v376 = vpack.c.b16 %v285, %v278
    %v377 = vpack.c.b16 %v286, %v279
    %v378 = vpack.c.b16 %v287, %v280
    %v379 = vpack.c.b16 %v288, %v281
    %v380 = vpack.c.b16 %v289, %v282
    %v381 = vpack.c.b16 %v290, %v283
    %v382 = vpack.c.b16 %v298, %v291
    %v383 = vpack.c.b16 %v299, %v292
    %v384 = vpack.c.b16 %v300, %v293
    %v385 = vpack.c.b16 %v301, %v294
    %v386 = vpack.c.b16 %v302, %v295
    %v387 = vpack.c.b16 %v303, %v296
    %v388 = vpack.c.b16 %v304, %v297
    %v389 = vpack.c.b16 %v312, %v305
    %v390 = vpack.c.b16 %v313, %v306
    %v391 = vpack.c.b16 %v314, %v307
    %v392 = vpack.c.b16 %v315, %v308
    %v393 = vpack.c.b16 %v316, %v309
    %v394 = vpack.c.b16 %v317, %v310
    %v395 = vpack.c.b16 %v318, %v311
    %v396 = vpack.c.b16 %v326, %v319
    %v397 = vpack.c.b16 %v327, %v320
    %v398 = vpack.c.b16 %v328, %v321
    %v399 = vpack.c.b16 %v329, %v322
    %v400 = vpack.c.b16 %v330, %v323
    %v401 = vpack.c.b16 %v331, %v324
    %v402 = vpack.c.b16 %v332, %v325
    %v403 = vpack.c.b16 %v340, %v333
    %v404 = vpack.c.b16 %v341, %v334
    %v405 = vpack.c.b16 %v342, %v335
    %v406 = vpack.c.b16 %v343, %v336
    %v407 = vpack.c.b16 %v344, %v337
    %v408 = vpack.c.b16 %v345, %v338
    %v409 = vpack.c.b16 %v346, %v339
    %v410 = vpack.c.b16 %v354, %v347
    %v411 = vpack.c.b16 %v355, %v348
    %v412 = vpack.c.b16 %v356, %v349
    %v413 = vpack.c.b16 %v357, %v350
    %v414 = vpack.c.b16 %v358, %v351
    %v415 = vpack.c.b16 %v359, %v352
    %v416 = vpack.c.b16 %v360, %v353
    %473 = vmatpush.bf16.msra.mxu0 %v410
    %474 = vmatpush.bf16.msra.mxu0 %v403
    %475 = vmatpush.bf16.msra.mxu0 %v396
    %476 = vmatpush.bf16.msra.mxu0 %v389
    %477 = vmatpush.bf16.msra.mxu0 %v382
    %478 = vmatpush.bf16.msra.mxu0 %v375
    %479 = vmatpush.bf16.msra.mxu0 %v368
    %480 = vmatpush.bf16.msra.mxu0 %v361
    %481 = vmatmul.bf16.gmra.mxu0 %v104
    %v482 = vpop.f32.mrf.mxu0
    %v483 = vadd.f32 %v171, %v482
    %v484 = vpop.f32.mrf.mxu0
    %485 = vdwg.mxu0
    %486 = vmatpush.bf16.msra.mxu0 %v411
    %487 = vmatpush.bf16.msra.mxu0 %v404
    %488 = vmatpush.bf16.msra.mxu0 %v397
    %489 = vmatpush.bf16.msra.mxu0 %v390
    %490 = vmatpush.bf16.msra.mxu0 %v383
    %491 = vmatpush.bf16.msra.mxu0 %v376
    %492 = vmatpush.bf16.msra.mxu0 %v369
    %493 = vmatpush.bf16.msra.mxu0 %v362
    %494 = vmatmul.bf16.gmra.mxu0 %v104
    %v495 = vpop.f32.mrf.mxu0
    %v496 = vadd.f32 %v172, %v495
    %v497 = vpop.f32.mrf.mxu0
    %498 = vdwg.mxu0
    %499 = vmatpush.bf16.msra.mxu0 %v412
    %500 = vmatpush.bf16.msra.mxu0 %v405
    %501 = vmatpush.bf16.msra.mxu0 %v398
    %502 = vmatpush.bf16.msra.mxu0 %v391
    %503 = vmatpush.bf16.msra.mxu0 %v384
    %504 = vmatpush.bf16.msra.mxu0 %v377
    %505 = vmatpush.bf16.msra.mxu0 %v370
    %506 = vmatpush.bf16.msra.mxu0 %v363
    %507 = vmatmul.bf16.gmra.mxu0 %v104
    %v508 = vpop.f32.mrf.mxu0
    %v509 = vadd.f32 %v173, %v508
    %v510 = vpop.f32.mrf.mxu0
    %511 = vdwg.mxu0
    %512 = vmatpush.bf16.msra.mxu0 %v413
    %513 = vmatpush.bf16.msra.mxu0 %v406
    %514 = vmatpush.bf16.msra.mxu0 %v399
    %515 = vmatpush.bf16.msra.mxu0 %v392
    %516 = vmatpush.bf16.msra.mxu0 %v385
    %517 = vmatpush.bf16.msra.mxu0 %v378
    %518 = vmatpush.bf16.msra.mxu0 %v371
    %519 = vmatpush.bf16.msra.mxu0 %v364
    %520 = vmatmul.bf16.gmra.mxu0 %v104
    %v521 = vpop.f32.mrf.mxu0
    %v522 = vadd.f32 %v174, %v521
    %v523 = vpop.f32.mrf.mxu0
    %524 = vdwg.mxu0
    %525 = vmatpush.bf16.msra.mxu0 %v414
    %526 = vmatpush.bf16.msra.mxu0 %v407
    %527 = vmatpush.bf16.msra.mxu0 %v400
    %528 = vmatpush.bf16.msra.mxu0 %v393
    %529 = vmatpush.bf16.msra.mxu0 %v386
    %530 = vmatpush.bf16.msra.mxu0 %v379
    %531 = vmatpush.bf16.msra.mxu0 %v372
    %532 = vmatpush.bf16.msra.mxu0 %v365
    %533 = vmatmul.bf16.gmra.mxu0 %v104
    %v534 = vpop.f32.mrf.mxu0
    %v535 = vadd.f32 %v175, %v534
    %v536 = vpop.f32.mrf.mxu0
    %537 = vdwg.mxu0
    %538 = vmatpush.bf16.msra.mxu0 %v415
    %539 = vmatpush.bf16.msra.mxu0 %v408
    %540 = vmatpush.bf16.msra.mxu0 %v401
    %541 = vmatpush.bf16.msra.mxu0 %v394
    %542 = vmatpush.bf16.msra.mxu0 %v387
    %543 = vmatpush.bf16.msra.mxu0 %v380
    %544 = vmatpush.bf16.msra.mxu0 %v373
    %545 = vmatpush.bf16.msra.mxu0 %v366
    %546 = vmatmul.bf16.gmra.mxu0 %v104
    %v547 = vpop.f32.mrf.mxu0
    %v548 = vadd.f32 %v176, %v547
    %v549 = vpop.f32.mrf.mxu0
    %550 = vdwg.mxu0
    %551 = vmatpush.bf16.msra.mxu0 %v416
    %552 = vmatpush.bf16.msra.mxu0 %v409
    %553 = vmatpush.bf16.msra.mxu0 %v402
    %554 = vmatpush.bf16.msra.mxu0 %v395
    %555 = vmatpush.bf16.msra.mxu0 %v388
    %556 = vmatpush.bf16.msra.mxu0 %v381
    %557 = vmatpush.bf16.msra.mxu0 %v374
    %558 = vmatpush.bf16.msra.mxu0 %v367
    %559 = vmatmul.bf16.gmra.mxu0 %v104
    %v560 = vpop.f32.mrf.mxu0
    %v561 = vadd.f32 %v177, %v560
    %v562 = vpop.f32.mrf.mxu0
    %563 = vdwg.mxu0
    %v564 = vtanh.pop %v483
    %v565 = vtanh.pop %v496
    %v566 = vtanh.pop %v509
    %v567 = vtanh.pop %v522
    %v568 = vtanh.pop %v535
    %v569 = vtanh.pop %v548
    %v570 = vtanh.pop %v561
    %v571 = vxor.u32 %v564, 2147483648
    %v572 = vxor.u32 %v565, 2147483648
    %v573 = vxor.u32 %v566, 2147483648
    %v574 = vxor.u32 %v567, 2147483648
    %v575 = vxor.u32 %v568, 2147483648
    %v576 = vxor.u32 %v569, 2147483648
    %v577 = vxor.u32 %v570, 2147483648
    %v578 = vmul.f32 %v571, 1.442695
    %v579 = vpow.pop %v578
    %v580 = vmul.f32 %v572, 1.442695
    %v581 = vpow.pop %v580
    %v582 = vmul.f32 %v573, 1.442695
    %v583 = vpow.pop %v582
    %v584 = vmul.f32 %v574, 1.442695
    %v585 = vpow.pop %v584
    %v586 = vmul.f32 %v575, 1.442695
    %v587 = vpow.pop %v586
    %v588 = vmul.f32 %v576, 1.442695
    %v589 = vpow.pop %v588
    %v590 = vmul.f32 %v577, 1.442695
    %v591 = vpow.pop %v590
    %v592 = vadd.f32 %v579, 1.0
    %v593 = vadd.f32 %v581, 1.0
    %v594 = vadd.f32 %v583, 1.0
    %v595 = vadd.f32 %v585, 1.0
    %v596 = vadd.f32 %v587, 1.0
    %v597 = vadd.f32 %v589, 1.0
    %v598 = vadd.f32 %v591, 1.0
    %v599 = vrcp.pop %v592
    %v600 = vmul.f32 %v592, %v599
    %v601 = vsub.f32 1.0, %v600
    %v602 = vmul.f32 %v599, %v601
    %v603 = vadd.f32 %v599, %v602
    %vm604 = vweird.f32 %v592
    %vm605 = vweird.f32 %v599
    %vm606 = vmor %vm604, %vm605
    %v607 = vsel %vm606, %v599, %v603
    %v608 = vand.u32 2147483647, %v592
    %vm609 = vcmp.eq.f32.partialorder %v608, 8.507059e+37
    %v610 = vand.u32 %v592, 2147483648
    %v611 = vor.u32 1.1754944e-38, %v610
    %v612 = vsel %vm609, %v611, %v607
    %v613 = vmul.f32 1.0, %v612
    %v614 = vrcp.pop %v593
    %v615 = vmul.f32 %v593, %v614
    %v616 = vsub.f32 1.0, %v615
    %v617 = vmul.f32 %v614, %v616
    %v618 = vadd.f32 %v614, %v617
    %vm619 = vweird.f32 %v593
    %vm620 = vweird.f32 %v614
    %vm621 = vmor %vm619, %vm620
    %v622 = vsel %vm621, %v614, %v618
    %v623 = vand.u32 2147483647, %v593
    %vm624 = vcmp.eq.f32.partialorder %v623, 8.507059e+37
    %v625 = vand.u32 %v593, 2147483648
    %v626 = vor.u32 1.1754944e-38, %v625
    %v627 = vsel %vm624, %v626, %v622
    %v628 = vmul.f32 1.0, %v627
    %v629 = vrcp.pop %v594
    %v630 = vmul.f32 %v594, %v629
    %v631 = vsub.f32 1.0, %v630
    %v632 = vmul.f32 %v629, %v631
    %v633 = vadd.f32 %v629, %v632
    %vm634 = vweird.f32 %v594
    %vm635 = vweird.f32 %v629
    %vm636 = vmor %vm634, %vm635
    %v637 = vsel %vm636, %v629, %v633
    %v638 = vand.u32 2147483647, %v594
    %vm639 = vcmp.eq.f32.partialorder %v638, 8.507059e+37
    %v640 = vand.u32 %v594, 2147483648
    %v641 = vor.u32 1.1754944e-38, %v640
    %v642 = vsel %vm639, %v641, %v637
    %v643 = vmul.f32 1.0, %v642
    %v644 = vrcp.pop %v595
    %v645 = vmul.f32 %v595, %v644
    %v646 = vsub.f32 1.0, %v645
    %v647 = vmul.f32 %v644, %v646
    %v648 = vadd.f32 %v644, %v647
    %vm649 = vweird.f32 %v595
    %vm650 = vweird.f32 %v644
    %vm651 = vmor %vm649, %vm650
    %v652 = vsel %vm651, %v644, %v648
    %v653 = vand.u32 2147483647, %v595
    %vm654 = vcmp.eq.f32.partialorder %v653, 8.507059e+37
    %v655 = vand.u32 %v595, 2147483648
    %v656 = vor.u32 1.1754944e-38, %v655
    %v657 = vsel %vm654, %v656, %v652
    %v658 = vmul.f32 1.0, %v657
    %v659 = vrcp.pop %v596
    %v660 = vmul.f32 %v596, %v659
    %v661 = vsub.f32 1.0, %v660
    %v662 = vmul.f32 %v659, %v661
    %v663 = vadd.f32 %v659, %v662
    %vm664 = vweird.f32 %v596
    %vm665 = vweird.f32 %v659
    %vm666 = vmor %vm664, %vm665
    %v667 = vsel %vm666, %v659, %v663
    %v668 = vand.u32 2147483647, %v596
    %vm669 = vcmp.eq.f32.partialorder %v668, 8.507059e+37
    %v670 = vand.u32 %v596, 2147483648
    %v671 = vor.u32 1.1754944e-38, %v670
    %v672 = vsel %vm669, %v671, %v667
    %v673 = vmul.f32 1.0, %v672
    %v674 = vrcp.pop %v597
    %v675 = vmul.f32 %v597, %v674
    %v676 = vsub.f32 1.0, %v675
    %v677 = vmul.f32 %v674, %v676
    %v678 = vadd.f32 %v674, %v677
    %vm679 = vweird.f32 %v597
    %vm680 = vweird.f32 %v674
    %vm681 = vmor %vm679, %vm680
    %v682 = vsel %vm681, %v674, %v678
    %v683 = vand.u32 2147483647, %v597
    %vm684 = vcmp.eq.f32.partialorder %v683, 8.507059e+37
    %v685 = vand.u32 %v597, 2147483648
    %v686 = vor.u32 1.1754944e-38, %v685
    %v687 = vsel %vm684, %v686, %v682
    %v688 = vmul.f32 1.0, %v687
    %v689 = vrcp.pop %v598
    %v690 = vmul.f32 %v598, %v689
    %v691 = vsub.f32 1.0, %v690
    %v692 = vmul.f32 %v689, %v691
    %v693 = vadd.f32 %v689, %v692
    %vm694 = vweird.f32 %v598
    %vm695 = vweird.f32 %v689
    %vm696 = vmor %vm694, %vm695
    %v697 = vsel %vm696, %v689, %v693
    %v698 = vand.u32 2147483647, %v598
    %vm699 = vcmp.eq.f32.partialorder %v698, 8.507059e+37
    %v700 = vand.u32 %v598, 2147483648
    %v701 = vor.u32 1.1754944e-38, %v700
    %v702 = vsel %vm699, %v701, %v697
    %v703 = vmul.f32 1.0, %v702
    %v704 = vpack.c.bf16 %v628, %v613
    %v705 = vpack.c.bf16 %v658, %v643
    %v706 = vpack.c.bf16 %v688, %v673
    %v707 = vpack.c.bf16 %v703, %v703
    %708 = vst [vmem:[#allocation2] sm:$0xff] %v704
    %709 = vst [vmem:[#allocation2 + $0x8] sm:$0xff] %v705
    %710 = vst [vmem:[#allocation2 + $0x10] sm:$0xff] %v706
    %vm711 = vcmask 125952
    %712 = vst.msk [vmem:[#allocation2 + $0x18] sm:$0xf] %vm711, %v707
    // Predicated region
    $region22: #{tpu_custom_call.1} parent=1 // pred_check
      _
    $region23: #{tpu_custom_call.1} parent=1 // pred_check_branch
      %714 = sbr.rel (0) target = $region25
    $region24: #{tpu_custom_call.1} parent=1 // pred_region
      %716 = vsyncadd [#allocation3], 0
      %s718 = sshll.u32 [#allocation2], 4
      %s719 = int_to_ptr.vmem [resolvable:$true] %s718
      %s720 = sshll.u32 %s5, 4
      %s721 = int_to_ptr.hbm [resolvable:$true] %s720
      %723 = dma.vmem_to_hbm [thread:$0]  %s719, 448, %s721, [#allocation3]
    $region25: #{tpu_custom_call.1} parent=1 // pred_fallthru
      _
    // Predicated region
    $region26: #{tpu_custom_call.1} parent=1 // pred_check
      _
    $region27: #{tpu_custom_call.1} parent=1 // pred_check_branch
      %725 = sbr.rel (0) target = $region29
    $region28: #{tpu_custom_call.1} parent=1 // pred_region
      %727 = dma.done [#allocation3], 448
    $region29: #{tpu_custom_call.1} parent=1 // pred_fallthru
      _
    %728 = vsyncpa [#allocation3], 1

</llo_original>
